<compile_context>
chip_gen: v6e
topology: v6e:2x2x1
jax: 0.10.0
libtpu: 0.0.40
codegen_flags: <defaults>
</compile_context>

<pallas_src>
import math

import jax
import jax.numpy as jnp
from jax.experimental import pallas as pl
from jax.experimental.pallas import tpu as pltpu


# ---------------------------------------------------------------------------
# pe table construction (plain JAX, identical to the PyTorch __init__)
# ---------------------------------------------------------------------------
def build_pe(d_model: int, max_len: int = 512) -> jnp.ndarray:
    pos = jnp.arange(max_len, dtype=jnp.float32)[:, None]                  # (max_len, 1)
    div = jnp.exp(
        jnp.arange(0, d_model, 2, dtype=jnp.float32)
        * (-math.log(10000.0) / d_model)
    )                                                                       # (d_model/2,)
    pe = jnp.zeros((max_len, d_model), dtype=jnp.float32)
    pe = pe.at[:, 0::2].set(jnp.sin(pos * div))
    pe = pe.at[:, 1::2].set(jnp.cos(pos * div))
    return pe                                                               # (max_len, D)


# ---------------------------------------------------------------------------
# Small helpers
# ---------------------------------------------------------------------------
def _round_up(v: int, m: int) -> int:
    return ((v + m - 1) // m) * m


def _sublane_quantum(dtype) -> int:
    # packed sublane tile height: 8 for 4-byte, 16 for 2-byte, 32 for 1-byte dtypes
    return max(8, 32 // jnp.dtype(dtype).itemsize)


def _vmem_budget_and_limit():
    """Per-step live-VMEM budget and the explicit scoped-VMEM limit to request."""
    phys = 64 << 20  # conservative default (v7x physical VMEM per TensorCore)
    try:
        info = pltpu.get_tpu_info()
        v = getattr(info, "vmem_capacity_bytes", None)
        if v:
            phys = int(v)
    except Exception:
        pass
    budget = int(min(16 << 20, max(4 << 20, phys // 4)))   # live bytes per pipeline step
    limit = int(min(32 << 20, phys // 2))                  # explicit scoped-VMEM raise
    return budget, max(limit, 2 * budget)


def _largest_tile(full: int, quantum: int, max_tile: int) -> int:
    """Largest tile <= max_tile: the full dim if it fits, else a multiple of
    `quantum`, preferring divisors of `full` (no ragged tail block)."""
    if full <= max_tile:
        return full
    t = max(quantum, (max_tile // quantum) * quantum)
    d = t
    while d >= quantum:
        if full % d == 0:
            return d
        d -= quantum
    return t


def _pick_lane_width(flat_len: int, q: int) -> int:
    """Largest L (multiple of 128 dividing flat_len) whose row count flat_len//L
    is a multiple of the sublane quantum; else the largest L with >= q rows;
    else flat_len (rows == 1 -> handled by the 2-D path)."""
    m = flat_len // 128
    best = 0
    for k in range(m, 0, -1):
        if m % k:
            continue
        rows = m // k
        if rows % q == 0:
            return 128 * k
        if best == 0 and rows >= q:
            best = 128 * k
    return best if best else flat_len


# ---------------------------------------------------------------------------
# Kernels (pure VPU elementwise add; pe broadcast over batch/sublanes)
# ---------------------------------------------------------------------------
def _pe_add_batched_kernel(x_ref, pe_ref, o_ref):
    # x_ref/o_ref: (B, ts, D);  pe_ref: (ts, D)  -> leading-dim replication
    o_ref[...] = x_ref[...] + pe_ref[...][None, :, :]


def _pe_add_kernel(x_ref, pe_ref, o_ref):
    # x_ref/o_ref/pe_ref: (ts, D)  (batch dim squeezed out by the BlockSpec)
    o_ref[...] = x_ref[...] + pe_ref[...]


def _pe_add_rowbcast_kernel(x_ref, pe_ref, o_ref):
    # x_ref/o_ref: (B, tf);  pe_ref: (1, tf)  -> sublane broadcast
    o_ref[...] = x_ref[...] + pe_ref[...]


# ---------------------------------------------------------------------------
# Pallas wrappers
# ---------------------------------------------------------------------------
def _add_pe_seq_tiled(x, pe_tbl, *, donate_x: bool = False):
    """x: (B, S, D); pe_tbl: (P, D) with P >= S.  Returns x + pe_tbl[:S]."""
    B, S, D = x.shape
    dtype = x.dtype
    itemsize = jnp.dtype(dtype).itemsize
    q = _sublane_quantum(dtype)
    d_pad = _round_up(D, 128)
    budget, vmem_limit = _vmem_budget_and_limit()
    io_alias = {0: 0} if donate_x else {}

    # Live VMEM per grid step with the whole batch folded into the block:
    # (x block + out block + pe block) * 2 pipeline buffers, lane-padded sizes.
    folded_bytes_per_row = 2 * (2 * B + 1) * d_pad * itemsize
    min_ts = max(1, min(q, S))

    if folded_bytes_per_row * min_ts <= budget:
        # ---- preferred path: one grid axis over S, whole batch per block ----
        max_ts = max(min_ts, budget // folded_bytes_per_row)
        ts = _largest_tile(S, q, max_ts)
        if (S + ts - 1) // ts < 2 and S > q:
            # Force >= 2 sequence tiles so v7x's second TensorCore gets work.
            ts = _round_up((S + 1) // 2, q)
        if ts == S and S % 8 != 0 and pe_tbl.shape[0] != S:
            # Block first dim must be a multiple of 8 or equal the array dim.
            pe_tbl = pe_tbl[:S]
        return pl.pallas_call(
            _pe_add_batched_kernel,
            out_shape=jax.ShapeDtypeStruct((B, S, D), dtype),
            grid_spec=pltpu.PrefetchScalarGridSpec(
                num_scalar_prefetch=0,
                grid=(pl.cdiv(S, ts),),
                in_specs=[
                    pl.BlockSpec((B, ts, D), lambda s: (0, s, 0)),   # x, full batch
                    pl.BlockSpec((ts, D), lambda s: (s, 0)),         # shared pe tile
                ],
                out_specs=pl.BlockSpec((B, ts, D), lambda s: (0, s, 0)),
            ),
            compiler_params=pltpu.CompilerParams(
                dimension_semantics=("parallel",),
                vmem_limit_bytes=vmem_limit,
            ),
            input_output_aliases=io_alias,
        )(x, pe_tbl)

    # ---- fallback (huge B*D): batch as an inner grid axis, batch dim squeezed ----
    per_batch_bytes_per_row = 6 * d_pad * itemsize   # (x + out + pe) * 2 buffers
    max_ts = max(min_ts, budget // per_batch_bytes_per_row)
    ts = _largest_tile(S, q, max_ts)
    if ts == S and S % 8 != 0 and pe_tbl.shape[0] != S:
        pe_tbl = pe_tbl[:S]
    return pl.pallas_call(
        _pe_add_kernel,
        out_shape=jax.ShapeDtypeStruct((B, S, D), dtype),
        grid_spec=pltpu.PrefetchScalarGridSpec(
            num_scalar_prefetch=0,
            # B innermost: pe block index is constant across it, so its DMA is
            # skipped for consecutive steps on the same core.
            grid=(pl.cdiv(S, ts), B),
            in_specs=[
                pl.BlockSpec((None, ts, D), lambda s, b: (b, s, 0)),
                pl.BlockSpec((ts, D), lambda s, b: (s, 0)),
            ],
            out_specs=pl.BlockSpec((None, ts, D), lambda s, b: (b, s, 0)),
        ),
        compiler_params=pltpu.CompilerParams(
            dimension_semantics=("parallel", "parallel"),
            vmem_limit_bytes=vmem_limit,
        ),
        input_output_aliases=io_alias,
    )(x, pe_tbl)


def _add_pe_2d(x2, pe2, *, donate_x: bool = False):
    """x2: (B, F); pe2: (1, F).  Lane-dense add with sublane broadcast of pe."""
    B, F = x2.shape
    dtype = x2.dtype
    itemsize = jnp.dtype(dtype).itemsize
    q = _sublane_quantum(dtype)
    budget, vmem_limit = _vmem_budget_and_limit()
    b_pad = _round_up(B, q)
    bytes_per_lane = 2 * (2 * b_pad + q) * itemsize   # x + out + pe, 2 buffers, padded
    max_tf = max(128, ((budget // bytes_per_lane) // 128) * 128)
    tf = _largest_tile(F, 128, max_tf)
    if (F + tf - 1) // tf < 2 and F > 128:
        tf = _round_up((F + 1) // 2, 128)             # give v7x's second core work
    return pl.pallas_call(
        _pe_add_rowbcast_kernel,
        out_shape=jax.ShapeDtypeStruct((B, F), dtype),
        grid_spec=pltpu.PrefetchScalarGridSpec(
            num_scalar_prefetch=0,
            grid=(pl.cdiv(F, tf),),
            in_specs=[
                pl.BlockSpec((B, tf), lambda f: (0, f)),
                pl.BlockSpec((1, tf), lambda f: (0, f)),
            ],
            out_specs=pl.BlockSpec((B, tf), lambda f: (0, f)),
        ),
        compiler_params=pltpu.CompilerParams(
            dimension_semantics=("parallel",),
            vmem_limit_bytes=vmem_limit,
        ),
        input_output_aliases={0: 0} if donate_x else {},
    )(x2, pe2)


def positional_encoding(x: jnp.ndarray, pe: jnp.ndarray, *, donate_x: bool = False) -> jnp.ndarray:
    """x: (B, S, D); pe: (max_len, D).  Returns x + pe[:S] (broadcast over batch)."""
    B, S, D = x.shape
    assert pe.shape[0] >= S, "sequence longer than the positional-encoding table"
    # TODO(synk): PyTorch promotes half/bf16 x to float32 here (x + float32 buffer);
    # we keep the activation dtype instead (cheaper; numerically equivalent add).
    same_dtype = pe.dtype == x.dtype

    if D % 128 == 0:
        # Lane-aligned: pass the full table when no cast is needed (the kernel
        # only DMAs the first cdiv(S, ts) row-blocks), avoiding a slice+copy.
        pe_tbl = pe if same_dtype else pe[:S].astype(x.dtype)
        return _add_pe_seq_tiled(x, pe_tbl, donate_x=donate_x)

    if (S * D) % 128 == 0:
        # D alone would leave every store lane-masked; re-express lane-densely.
        q = _sublane_quantum(x.dtype)
        L = _pick_lane_width(S * D, q)
        rows = (S * D) // L
        pe_flat = pe[:S].astype(x.dtype).reshape(max(rows, 1), L)
        if rows >= 2:
            out = _add_pe_seq_tiled(x.reshape(B, rows, L), pe_flat, donate_x=donate_x)
        else:
            out = _add_pe_2d(x.reshape(B, S * D), pe_flat.reshape(1, S * D),
                             donate_x=donate_x)
        return out.reshape(B, S, D)

    # Last resort (S*D not lane-aligned): correct, but stores are lane-masked.
    pe_tbl = pe if same_dtype else pe[:S].astype(x.dtype)
    return _add_pe_seq_tiled(x, pe_tbl, donate_x=donate_x)


if __name__ == "__main__":
    MAX_LEN = 512

    # Case 1: small shapes consistent with the module (batch=2, seq=8, d_model=32).
    # D % 128 != 0 -> lane-dense re-expression path.
    B, S, D = 2, 8, 32
    x = jax.random.normal(jax.random.PRNGKey(0), (B, S, D), dtype=jnp.float32)
    pe = build_pe(D, MAX_LEN)
    out = jax.block_until_ready(positional_encoding(x, pe))
    ref = x + pe[None, :S, :]
    assert out.shape == (B, S, D)
    assert jnp.allclose(out, ref, atol=1e-6), "lane-dense path mismatch vs reference"

    # Case 2: lane-aligned D, batch-folded sequence-tiled path (also exercises the
    # forced 2-way S split for v7x megacore and the full-table pe pass-through).
    B2, S2, D2 = 2, 16, 128
    x2 = jax.random.normal(jax.random.PRNGKey(1), (B2, S2, D2), dtype=jnp.float32)
    pe2 = build_pe(D2, MAX_LEN)
    out2 = jax.block_until_ready(positional_encoding(x2, pe2))
    ref2 = x2 + pe2[None, :S2, :]
    assert jnp.allclose(out2, ref2, atol=1e-6), "seq-tiled path mismatch vs reference"

    # Case 3: bf16 activations (dtype-aware sublane quantum + ragged edge block).
    B3, S3, D3 = 2, 24, 128
    x3 = jax.random.normal(jax.random.PRNGKey(2), (B3, S3, D3),
                           dtype=jnp.float32).astype(jnp.bfloat16)
    pe3 = build_pe(D3, MAX_LEN)
    out3 = jax.block_until_ready(positional_encoding(x3, pe3))
    ref3 = x3 + pe3[:S3].astype(jnp.bfloat16)[None, :, :]
    assert jnp.allclose(out3.astype(jnp.float32), ref3.astype(jnp.float32),
                        atol=1e-2), "bf16 path mismatch vs reference"

    print("KERNEL_OK")
</pallas_src>

<mosaic_0001>
module attributes {stable_mosaic.version = 11 : i64} {
  func.func @_pe_add_rowbcast_kernel(%arg0: i32, %arg1: memref<2x128xf32, #tpu.memory_space<vmem>>, %arg2: memref<1x128xf32, #tpu.memory_space<vmem>>, %arg3: memref<2x128xf32, #tpu.memory_space<vmem>>) attributes {dimension_semantics = [#tpu.dimension_semantics<parallel>], iteration_bounds = array<i64: 2>, scalar_prefetch = 0 : i64, scratch_operands = 0 : i64, tpu.core_type = #tpu.core_type<tc>, window_params = [{transform_indices = @transform_0, window_bounds = array<i64: 2, 128>}, {transform_indices = @transform_1, window_bounds = array<i64: 1, 128>}, {transform_indices = @transform_2, window_bounds = array<i64: 2, 128>}]} {
    %c0 = arith.constant 0 : index
    %c0_0 = arith.constant 0 : index
    %0 = vector.load %arg1[%c0, %c0_0] : memref<2x128xf32, #tpu.memory_space<vmem>>, vector<2x128xf32>
    %c0_1 = arith.constant 0 : index
    %c0_2 = arith.constant 0 : index
    %1 = vector.load %arg2[%c0_1, %c0_2] : memref<1x128xf32, #tpu.memory_space<vmem>>, vector<1x128xf32>
    %2 = vector.broadcast %1 : vector<1x128xf32> to vector<2x128xf32>
    %3 = arith.addf %0, %2 : vector<2x128xf32>
    %c0_3 = arith.constant 0 : index
    %c0_4 = arith.constant 0 : index
    %4 = vector.load %arg3[%c0_3, %c0_4] : memref<2x128xf32, #tpu.memory_space<vmem>>, vector<2x128xf32>
    tpu.vector_store %arg3[%c0_3, %c0_4], %3 {strides = array<i32>} : memref<2x128xf32, #tpu.memory_space<vmem>>, vector<2x128xf32>,
    return
  }
  func.func @transform_0(%arg0: i32) -> (i32, i32) {
    %c0_i32 = arith.constant 0 : i32
    %c0_i32_0 = arith.constant 0 : i32
    return %c0_i32, %arg0 : i32, i32
  }
  func.func @transform_1(%arg0: i32) -> (i32, i32) {
    %c0_i32 = arith.constant 0 : i32
    %c0_i32_0 = arith.constant 0 : i32
    return %c0_i32, %arg0 : i32, i32
  }
  func.func @transform_2(%arg0: i32) -> (i32, i32) {
    %c0_i32 = arith.constant 0 : i32
    %c0_i32_0 = arith.constant 0 : i32
    return %c0_i32, %arg0 : i32, i32
  }
}

</mosaic_0001>

<llo_original>
// kernel: tpu_custom_call.1
$region0: #{tpu_custom_call.1}
  #allocation0 [shape = 'u32[]', space=smem, size = 0x4, offset = 0x4, fixed_abs, tag = 'smem constant byte address 0x4 - core index']
  #allocation1 [shape = 'u32[144,128]{1,0:T(1,128)}', space=vmem, size = 0x12000, scoped, tag = 'internal scratch']
  %s0 = inlined_call_operand.hbm [shape: f32[2,256], index: 0, kind: input, shape index: {}]
  %s1 = inlined_call_operand.hbm [shape: f32[1,256], index: 1, kind: input, shape index: {}]
  %s2 = inlined_call_operand.hbm [shape: f32[2,256], index: 2, kind: output, shape index: {}]
  %s3 = sld [smem:[#allocation0]]
  $region49: #{tpu_custom_call.1} parent=0
    _
  %s5 = ssub.s32 1, %s3
  %s6 = scalar_select 0, %s5, %s3
  $region1: #{tpu_custom_call.1} parent=0
    #allocation2 [shape = 'u8[2048]{0}', space=vmem, size = 0x800, scoped, tag = 'input window, operand 0']
    #allocation3 [shape = 's32[2]{0}', space=sflag, size = 0x8, scoped, tag = 'scoped memory for tpu_custom_call.1']
    #allocation4 [shape = 's32[2]{0}', space=sflag, size = 0x8, scoped, tag = 'scoped memory for tpu_custom_call.1']
    #allocation5 [shape = 'u8[1024]{0}', space=vmem, size = 0x400, scoped, tag = 'input window, operand 1']
    #allocation6 [shape = 's32[2]{0}', space=sflag, size = 0x8, scoped, tag = 'scoped memory for tpu_custom_call.1']
    #allocation7 [shape = 'u8[2048]{0}', space=vmem, size = 0x800, scoped, tag = 'output window, operand 0']
    %7 = vsyncpa [#allocation3], 0
    %s8 = scalar_lea.sflag [#allocation3], 1
    %9 = vsyncpa %s8, 0
    %10 = vsyncpa [#allocation6], 0
    %s11 = scalar_lea.sflag [#allocation6], 1
    %12 = vsyncpa %s11, 0
    %13 = vsyncpa [#allocation4], 0
    %s14 = scalar_lea.sflag [#allocation4], 1
    %15 = vsyncpa %s14, 0
    loop: start=0, step=1, limit=4
    $region2: #{tpu_custom_call.1} parent=1 // loop_pre_header
      _
    $region3: #{tpu_custom_call.1} parent=1 // loop_header
      %s17 = sphi 0, %s21
      %p18 = scmp.ge.s32.totalorder %s17, 4
      %s27 = sphi 0, %s29
      %s30 = sphi 0, %s27
      %s31 = sphi 0, %s30
      %s47 = sphi 0, %s31
      %s53 = sphi 0, %s55
      %s56 = sphi 0, %s53
      %s57 = sphi 0, %s56
      %s73 = sphi 0, %s57
      %s79 = sphi 0, %s81
      %s82 = sphi 0, %s79
      %s83 = sphi 0, %s82
      %s99 = sphi 0, %s83
    $region4: #{tpu_custom_call.1} parent=1 // loop_header_branch
      %20 = sbr.rel (%p18) target = $region8
    $region5: #{tpu_custom_call.1} parent=1 // loop_body
      %s22 = ssub.s32 %s17, 1
      %s23 = ssub.s32 %s17, 2
      %s24 = sadd.s32 %s17, 1
      %s25 = ssub.s32 %s17, %s24
      %p26 = scmp.eq.s32.totalorder %s25, 0
      %s28 = sadd.s32 %s27, 1
      %s29 = scalar_select %p26, %s27, %s28
      %p32 = pneg %p26
      %p33 = scmp.eq.s32.totalorder %s17, 1
      %p34 = por %p32, %p33
      %p35 = scmp.ne.s32.totalorder %s27, %s30
      %p36 = scmp.eq.s32.totalorder %s17, 0
      %p37 = por %p35, %p36
      %p38 = scmp.ne.s32.totalorder %s27, %s30
      %p39 = scmp.eq.s32.totalorder %s22, 1
      %p40 = por %p38, %p39
      %p41 = scmp.ne.s32.totalorder %s30, %s31
      %p42 = scmp.eq.s32.totalorder %s22, 0
      %p43 = por %p41, %p42
      %p44 = scmp.ne.s32.totalorder %s30, %s31
      %p45 = scmp.eq.s32.totalorder %s23, 1
      %p46 = por %p44, %p45
      %p48 = scmp.ne.s32.totalorder %s31, %s47
      %p49 = scmp.eq.s32.totalorder %s23, 0
      %p50 = por %p48, %p49
      %s51 = ssub.s32 %s17, %s24
      %p52 = scmp.eq.s32.totalorder %s51, 0
      %s54 = sadd.s32 %s53, 1
      %s55 = scalar_select %p52, %s53, %s54
      %p58 = pneg %p52
      %p59 = scmp.eq.s32.totalorder %s17, 1
      %p60 = por %p58, %p59
      %p61 = scmp.ne.s32.totalorder %s53, %s56
      %p62 = scmp.eq.s32.totalorder %s17, 0
      %p63 = por %p61, %p62
      %p64 = scmp.ne.s32.totalorder %s53, %s56
      %p65 = scmp.eq.s32.totalorder %s22, 1
      %p66 = por %p64, %p65
      %p67 = scmp.ne.s32.totalorder %s56, %s57
      %p68 = scmp.eq.s32.totalorder %s22, 0
      %p69 = por %p67, %p68
      %p70 = scmp.ne.s32.totalorder %s56, %s57
      %p71 = scmp.eq.s32.totalorder %s23, 1
      %p72 = por %p70, %p71
      %p74 = scmp.ne.s32.totalorder %s57, %s73
      %p75 = scmp.eq.s32.totalorder %s23, 0
      %p76 = por %p74, %p75
      %s77 = ssub.s32 %s17, %s24
      %p78 = scmp.eq.s32.totalorder %s77, 0
      %s80 = sadd.s32 %s79, 1
      %s81 = scalar_select %p78, %s79, %s80
      %p84 = pneg %p78
      %p85 = scmp.eq.s32.totalorder %s17, 1
      %p86 = por %p84, %p85
      %p87 = scmp.ne.s32.totalorder %s79, %s82
      %p88 = scmp.eq.s32.totalorder %s17, 0
      %p89 = por %p87, %p88
      %p90 = scmp.ne.s32.totalorder %s79, %s82
      %p91 = scmp.eq.s32.totalorder %s22, 1
      %p92 = por %p90, %p91
      %p93 = scmp.ne.s32.totalorder %s82, %s83
      %p94 = scmp.eq.s32.totalorder %s22, 0
      %p95 = por %p93, %p94
      %p96 = scmp.ne.s32.totalorder %s82, %s83
      %p97 = scmp.eq.s32.totalorder %s23, 1
      %p98 = por %p96, %p97
      %p100 = scmp.ne.s32.totalorder %s83, %s99
      %p101 = scmp.eq.s32.totalorder %s23, 0
      %p102 = por %p100, %p101
      %p103 = scmp.le.s32.totalorder 1, %s17
      %p104 = scmp.lt.s32.totalorder %s17, 3
      %p105 = pnand %p103, %p104
      %p106 = pneg %p105
      // Predicated region
      $region9: #{tpu_custom_call.1} parent=5 // pred_check
        _
      $region10: #{tpu_custom_call.1} parent=5 // pred_check_branch
        %108 = sbr.rel (%p105) target = $region12
      $region11: #{tpu_custom_call.1} parent=5 // pred_region
        %s109 = ssub.s32 %s17, 1
      $region12: #{tpu_custom_call.1} parent=5 // pred_fallthru
        _
      %p110 = scmp.lt.s32.totalorder %s17, 2
      // Predicated region
      $region13: #{tpu_custom_call.1} parent=5 // pred_check
        %p111 = pneg %p110
      $region14: #{tpu_custom_call.1} parent=5 // pred_check_branch
        %113 = sbr.rel (%p111) target = $region16
      $region15: #{tpu_custom_call.1} parent=5 // pred_region
        // Predicated region
        $region17: #{tpu_custom_call.1} parent=15 // pred_check
          %p114 = pneg %p37
        $region18: #{tpu_custom_call.1} parent=15 // pred_check_branch
          %116 = sbr.rel (%p114) target = $region20
        $region19: #{tpu_custom_call.1} parent=15 // pred_region
          %s117 = sand.u32 %s27, 1
          %s118 = scalar_lea.sflag [#allocation3], %s117
          %s119 = sand.u32 %s27, 1
          %s120 = smul.addr %s119, 2
          %s121 = scalar_lea.vmem [#allocation2], %s120
          %s123 = ssub.s32 32, 32
          %124 = vsyncadd %s118, %s123
          %s125 = smul.addr %s17, 32
          %s126 = scalar_lea.hbm %s0, %s125
          %s128 = sshll.u32 %s121, 4
          %s129 = int_to_ptr.vmem [resolvable:$true] %s128
          %131 = dma.hbm_to_vmem [thread:$0]  %s126, 32, %s129, %s118
        $region20: #{tpu_custom_call.1} parent=15 // pred_fallthru
          _
        // Predicated region
        $region21: #{tpu_custom_call.1} parent=15 // pred_check
          %p132 = pneg %p63
        $region22: #{tpu_custom_call.1} parent=15 // pred_check_branch
          %134 = sbr.rel (%p132) target = $region24
        $region23: #{tpu_custom_call.1} parent=15 // pred_region
          %s135 = sand.u32 %s53, 1
          %s136 = scalar_lea.sflag [#allocation6], %s135
          %s137 = sand.u32 %s53, 1
          %s138 = scalar_lea.vmem [#allocation5], %s137
          %s140 = ssub.s32 16, 16
          %141 = vsyncadd %s136, %s140
          %s142 = smul.addr %s17, 16
          %s143 = scalar_lea.hbm %s1, %s142
          %s145 = sshll.u32 %s138, 4
          %s146 = int_to_ptr.vmem [resolvable:$true] %s145
          %148 = dma.hbm_to_vmem [thread:$0]  %s143, 16, %s146, %s136
        $region24: #{tpu_custom_call.1} parent=15 // pred_fallthru
          _
      $region16: #{tpu_custom_call.1} parent=5 // pred_fallthru
        _
      %p149 = scmp.le.s32.totalorder 1, %s17
      %p150 = scmp.lt.s32.totalorder %s17, 3
      %p151 = pnand %p149, %p150
      %p152 = pneg %p151
      // Predicated region
      $region25: #{tpu_custom_call.1} parent=5 // pred_check
        _
      $region26: #{tpu_custom_call.1} parent=5 // pred_check_branch
        %154 = sbr.rel (%p151) target = $region28
      $region27: #{tpu_custom_call.1} parent=5 // pred_region
        %s155 = ssub.s32 %s17, 1
        %s156 = sand.u32 %s30, 1
        %s157 = scalar_lea.sflag [#allocation3], %s156
        %s158 = sand.u32 %s30, 1
        %s159 = smul.addr %s158, 2
        %s160 = scalar_lea.vmem [#allocation2], %s159
        // Predicated region
        $region29: #{tpu_custom_call.1} parent=27 // pred_check
          %p161 = pneg %p43
        $region30: #{tpu_custom_call.1} parent=27 // pred_check_branch
          %163 = sbr.rel (%p161) target = $region32
        $region31: #{tpu_custom_call.1} parent=27 // pred_region
          %164 = dma.done %s157, 32
        $region32: #{tpu_custom_call.1} parent=27 // pred_fallthru
          _
        %s165 = sand.u32 %s56, 1
        %s166 = scalar_lea.sflag [#allocation6], %s165
        %s167 = sand.u32 %s56, 1
        %s168 = scalar_lea.vmem [#allocation5], %s167
        // Predicated region
        $region33: #{tpu_custom_call.1} parent=27 // pred_check
          %p169 = pneg %p69
        $region34: #{tpu_custom_call.1} parent=27 // pred_check_branch
          %171 = sbr.rel (%p169) target = $region36
        $region35: #{tpu_custom_call.1} parent=27 // pred_region
          %172 = dma.done %s166, 16
        $region36: #{tpu_custom_call.1} parent=27 // pred_fallthru
          _
        %s173 = sand.u32 %s30, 1
        %s174 = scalar_lea.sflag [#allocation3], %s173
        %s175 = sand.u32 %s30, 1
        %s176 = smul.addr %s175, 2
        %s177 = scalar_lea.vmem [#allocation2], %s176
        %p178 = pneg %p43
        %p179 = pneg %p40
        %s180 = sand.u32 %s56, 1
        %s181 = scalar_lea.sflag [#allocation6], %s180
        %s182 = sand.u32 %s56, 1
        %s183 = scalar_lea.vmem [#allocation5], %s182
        %p184 = pneg %p69
        %p185 = pneg %p66
        %p186 = pneg %p95
        %p187 = pneg %p92
        %s188 = sand.u32 %s82, 1
        %s189 = scalar_lea.sflag [#allocation4], %s188
        %s190 = sand.u32 %s82, 1
        %s191 = smul.addr %s190, 2
        %s192 = scalar_lea.vmem [#allocation7], %s191
        %v193 = vld [vmem:[%s160] sm:$0x3]
        %v194 = vld [vmem:[%s168] sm:$0x1]
        %v196 = vlaneseq
        %v197 = vshrl.u32 %v196, 7
        %v198 = vsub.s32 0, %v197
        %v199 = vrot.slane %v194, %v198
        %v201 = vadd.f32 %v193, %v199
        %202 = vst [vmem:[%s192] sm:$0x3] %v201
        %s203 = sand.u32 %s82, 1
        %s204 = scalar_lea.sflag [#allocation4], %s203
        %s205 = sand.u32 %s82, 1
        %s206 = smul.addr %s205, 2
        %s207 = scalar_lea.vmem [#allocation7], %s206
        // Predicated region
        $region37: #{tpu_custom_call.1} parent=27 // pred_check
          %p208 = pneg %p92
        $region38: #{tpu_custom_call.1} parent=27 // pred_check_branch
          %210 = sbr.rel (%p208) target = $region40
        $region39: #{tpu_custom_call.1} parent=27 // pred_region
          %s212 = ssub.s32 32, 32
          %213 = vsyncadd %s204, %s212
          %s214 = smul.addr %s22, 32
          %s215 = scalar_lea.hbm %s2, %s214
          %s217 = sshll.u32 %s207, 4
          %s218 = int_to_ptr.vmem [resolvable:$true] %s217
          %220 = dma.vmem_to_hbm [thread:$0]  %s218, 32, %s215, %s204
        $region40: #{tpu_custom_call.1} parent=27 // pred_fallthru
          _
      $region28: #{tpu_custom_call.1} parent=5 // pred_fallthru
        _
      %p221 = scmp.le.s32.totalorder 2, %s17
      // Predicated region
      $region41: #{tpu_custom_call.1} parent=5 // pred_check
        %p222 = pneg %p221
      $region42: #{tpu_custom_call.1} parent=5 // pred_check_branch
        %224 = sbr.rel (%p222) target = $region44
      $region43: #{tpu_custom_call.1} parent=5 // pred_region
        %s225 = ssub.s32 %s17, 2
        // Predicated region
        $region45: #{tpu_custom_call.1} parent=43 // pred_check
          %p226 = pneg %p98
        $region46: #{tpu_custom_call.1} parent=43 // pred_check_branch
          %228 = sbr.rel (%p226) target = $region48
        $region47: #{tpu_custom_call.1} parent=43 // pred_region
          %s229 = sand.u32 %s83, 1
          %s230 = scalar_lea.sflag [#allocation4], %s229
          %s231 = sand.u32 %s83, 1
          %s232 = smul.addr %s231, 2
          %s233 = scalar_lea.vmem [#allocation7], %s232
          %234 = dma.done %s230, 32
        $region48: #{tpu_custom_call.1} parent=43 // pred_fallthru
          _
      $region44: #{tpu_custom_call.1} parent=5 // pred_fallthru
        _
    $region6: #{tpu_custom_call.1} parent=1 // loop_footer
      %s21 = sadd.s32 1, %s17
    $region7: #{tpu_custom_call.1} parent=1 // loop_footer_branch
      %16 = sbr.rel target = $region3
    $region8: #{tpu_custom_call.1} parent=1 // loop_exit
      _
    %235 = vsyncpa [#allocation3], 1
    %s236 = scalar_lea.sflag [#allocation3], 1
    %237 = vsyncpa %s236, 1
    %238 = vsyncpa [#allocation6], 1
    %s239 = scalar_lea.sflag [#allocation6], 1
    %240 = vsyncpa %s239, 1
    %241 = vsyncpa [#allocation4], 1
    %s242 = scalar_lea.sflag [#allocation4], 1
    %243 = vsyncpa %s242, 1

</llo_original>
